<compile_context>
chip_gen: v6e
topology: v6e:2x2x1
jax: 0.10.0
libtpu: 0.0.40
codegen_flags: <defaults>
</compile_context>

<pallas_src>
import jax
import jax.numpy as jnp
from jax import lax
from jax.experimental import pallas as pl
from jax.experimental.pallas import tpu as pltpu


def _sublane_pack(itemsize):
    # Sublane packing factor: 8 for 32-bit, 16 for 16-bit, 32 for 8-bit dtypes.
    return max(8, 32 // int(itemsize))


def _default_target_block_bytes():
    # Per-input block size target.  Bigger tiles amortize the ~0.35us per-step
    # overhead; keep 2 inputs x 2 pipeline buffers comfortably inside VMEM
    # (v5e/v6e: 128 MiB per TC, v7x: 64 MiB per TC).
    try:
        vmem = pltpu.get_tpu_info().vmem_capacity_bytes
    except Exception:
        return 6 * 1024 * 1024
    return 8 * 1024 * 1024 if vmem >= (96 << 20) else 6 * 1024 * 1024


def _choose_col_tile(Fp, tB, itemsize, target_bytes):
    # Largest multiple-of-128 divisor of Fp whose (tB x tC) block stays under
    # target_bytes.  Fp is always a multiple of 128 (wrapper pads), so 128 is
    # always a valid fallback.
    max_cols = max(target_bytes // (tB * itemsize), 128)
    best = 128
    c = 128
    while c <= Fp:
        if Fp % c == 0 and c <= max_cols:
            best = c
        c += 128
    return best


def masked_mse_loss(model_output, target, lengths, *, row_tile=None, col_tile=None,
                    target_block_bytes=None):
    """Pallas equivalent of MaskedLoss(nn.MSELoss(reduction='mean')).forward."""
    B, T, D = model_output.shape
    assert target.shape == model_output.shape
    F = T * D
    dtype = model_output.dtype
    itemsize = int(jnp.dtype(dtype).itemsize)

    # ---- scalar bookkeeping (pure wrapper math, nothing on the VPU) --------
    lengths = jnp.clip(lengths.astype(jnp.int32), 0, T)
    thresh = lengths * D                          # (B,) valid prefix length in [T*D]
    # NOTE: if sum(lengths) == 0 this divides by zero (NaN), matching
    # nn.MSELoss(reduction='mean') applied to an empty packed tensor.
    cnt = jnp.sum(thresh).astype(jnp.float32)

    # ---- lane/sublane-dense layout + padding to TPU-friendly shapes --------
    pack = _sublane_pack(itemsize)
    tB = int(row_tile) if row_tile is not None else pack
    Bp = -(-B // tB) * tB                         # pad rows to a multiple of tB
    Fp = -(-F // 128) * 128                       # pad cols to a multiple of 128

    x = model_output.reshape(B, F)
    y = target.reshape(B, F)
    if Bp != B or Fp != F:
        x = jnp.pad(x, ((0, Bp - B), (0, Fp - F)))
        y = jnp.pad(y, ((0, Bp - B), (0, Fp - F)))
        thresh = jnp.pad(thresh, (0, Bp - B))     # pad rows get thresh=0 (fully masked)

    if target_block_bytes is None:
        target_block_bytes = _default_target_block_bytes()
    tC = int(col_tile) if col_tile is not None else _choose_col_tile(
        Fp, tB, itemsize, target_block_bytes)
    assert Fp % tC == 0 and tC % 128 == 0
    assert Bp % tB == 0 and (tB % 8 == 0 or tB == Bp)

    R = Bp // tB                                  # row blocks ("parallel")
    C = Fp // tC                                  # column blocks (reduction)
    # v7x has 2 TensorCores sharded only along "parallel" axes: with a single
    # row block, split the column reduction into 2 parallel chunks.
    P = 2 if (R == 1 and C >= 2 and C % 2 == 0) else 1
    Cc = C // P

    # Per-row-block column-block counts (prefetched to SMEM):
    #   nvb  : blocks containing >=1 valid element (everything past it is skipped)
    #   nfull: blocks fully valid for every row    (unmasked fast path)
    tgrid = thresh.reshape(R, tB)
    nvb = (-(-jnp.max(tgrid, axis=1) // tC)).astype(jnp.int32)
    nfull = (jnp.min(tgrid, axis=1) // tC).astype(jnp.int32)
    thresh2d = thresh.reshape(Bp, 1).astype(jnp.int32)

    # Width of the vreg-resident chunk accumulator (multiple independent add
    # chains; also the partial-sum output width).
    ACCW = 512 if tC % 512 == 0 else (256 if tC % 256 == 0 else 128)
    nchunks = tC // ACCW

    def kernel(nfull_ref, nvb_ref, thresh_ref, x_ref, y_ref, part_ref):
        i = pl.program_id(0)
        p = pl.program_id(1)
        j = pl.program_id(2)
        jj = p * Cc + j                           # global column-block index

        @pl.when(j == 0)
        def _init():
            part_ref[...] = jnp.zeros_like(part_ref)

        def chunk_sq_diff(off):
            xd = x_ref[:, pl.ds(off, ACCW)].astype(jnp.float32)
            yd = y_ref[:, pl.ds(off, ACCW)].astype(jnp.float32)
            d = xd - yd
            return d * d

        # Fast path: every row of this row block is fully valid here -> no mask.
        @pl.when(jj < nfull_ref[i])
        def _full():
            def body(c, s):
                off = pl.multiple_of(c * ACCW, ACCW)
                return s + chunk_sq_diff(off)
            part_ref[...] += lax.fori_loop(0, nchunks, body,
                                           jnp.zeros((tB, ACCW), jnp.float32))

        # Boundary path: partially valid block -> mask with a lane iota
        # (hoisted out of the chunk loop) against the per-row threshold.
        @pl.when(jnp.logical_and(jj >= nfull_ref[i], jj < nvb_ref[i]))
        def _boundary():
            rel = thresh_ref[...] - jj * tC       # (tB, 1) int32
            lane = lax.broadcasted_iota(jnp.int32, (tB, ACCW), 1)

            def body(c, s):
                off = pl.multiple_of(c * ACCW, ACCW)
                valid = lane < (rel - off)        # (tB, ACCW) < (tB, 1)
                return s + jnp.where(valid, chunk_sq_diff(off), 0.0)
            part_ref[...] += lax.fori_loop(0, nchunks, body,
                                           jnp.zeros((tB, ACCW), jnp.float32))
        # Column blocks with jj >= nvb[i] are entirely padding: the index_map
        # clamps them to an already-fetched block (no new DMA) and no branch runs.

    def data_map(i, p, j, nfull_ref, nvb_ref):
        jj = p * Cc + j
        return (i, jnp.minimum(jj, jnp.maximum(nvb_ref[i] - 1, 0)))

    vmem_need = (2 * 2 * tB * tC * itemsize       # x, y double-buffered
                 + 2 * tB * ACCW * 4              # partial-sum output
                 + 2 * tB * 128 * 4)              # thresholds (lane-padded)
    vmem_limit = int(min(max(vmem_need + (8 << 20), 32 << 20), 48 << 20))

    partials = pl.pallas_call(
        kernel,
        out_shape=jax.ShapeDtypeStruct((R * P * tB, ACCW), jnp.float32),
        grid_spec=pltpu.PrefetchScalarGridSpec(
            num_scalar_prefetch=2,                # nfull, nvb -> SMEM
            grid=(R, P, Cc),                      # reduction (cols) last
            in_specs=[
                pl.BlockSpec((tB, 1), lambda i, p, j, nfull, nvb: (i, 0)),
                pl.BlockSpec((tB, tC), data_map),     # model_output
                pl.BlockSpec((tB, tC), data_map),     # target
            ],
            out_specs=pl.BlockSpec(
                (tB, ACCW), lambda i, p, j, nfull, nvb: (i * P + p, 0)),
        ),
        compiler_params=pltpu.CompilerParams(
            dimension_semantics=("parallel", "parallel", "arbitrary"),
            vmem_limit_bytes=vmem_limit,
        ),
    )(nfull, nvb, thresh2d, x, y)

    sse = jnp.sum(partials)
    return sse / cnt


def _reference(mo, tg, lens):
    B, T, D = mo.shape
    lens = jnp.clip(lens.astype(jnp.int32), 0, T)
    mask = (jnp.arange(T)[None, :] < lens[:, None]).astype(jnp.float32)[..., None]
    return jnp.sum(mask * (mo - tg) ** 2) / (jnp.sum(lens).astype(jnp.float32) * D)


if __name__ == "__main__":
    key = jax.random.PRNGKey(0)
    k1, k2, k3, k4, k5, k6, k7, k8 = jax.random.split(key, 8)

    # Test 1: module-implied small shape (batch=2, seq=8, hidden=32), f32.
    mo1 = jax.random.normal(k1, (2, 8, 32), jnp.float32)
    tg1 = jax.random.normal(k2, (2, 8, 32), jnp.float32)
    ln1 = jnp.array([8, 5], jnp.int32)          # descending, pack_padded_sequence style
    l1 = masked_mse_loss(mo1, tg1, ln1)
    jax.block_until_ready(l1)
    r1 = _reference(mo1, tg1, ln1)
    assert jnp.allclose(l1, r1, rtol=1e-4, atol=1e-6), (l1, r1)

    # Test 2: multiple row/column blocks, boundary masking, skipped padded tiles.
    mo2 = jax.random.normal(k3, (16, 8, 32), jnp.float32)
    tg2 = jax.random.normal(k4, (16, 8, 32), jnp.float32)
    ln2 = jnp.array([8, 8, 7, 7, 6, 6, 5, 5, 4, 4, 3, 3, 2, 2, 1, 1], jnp.int32)
    l2 = masked_mse_loss(mo2, tg2, ln2, row_tile=8, col_tile=128)
    jax.block_until_ready(l2)
    r2 = _reference(mo2, tg2, ln2)
    assert jnp.allclose(l2, r2, rtol=1e-4, atol=1e-6), (l2, r2)

    # Test 3: bf16 inputs (16-row sublane packing), padded feature dim, multi-chunk loop.
    mo3 = jax.random.normal(k5, (4, 16, 20), jnp.float32).astype(jnp.bfloat16)
    tg3 = jax.random.normal(k6, (4, 16, 20), jnp.float32).astype(jnp.bfloat16)
    ln3 = jnp.array([16, 9, 4, 1], jnp.int32)
    l3 = masked_mse_loss(mo3, tg3, ln3)
    jax.block_until_ready(l3)
    r3 = _reference(mo3.astype(jnp.float32), tg3.astype(jnp.float32), ln3)
    assert jnp.allclose(l3, r3, rtol=1e-4, atol=1e-6), (l3, r3)

    # Test 4: single row block -> 2-way parallel column split (v7x megacore path).
    mo4 = jax.random.normal(k7, (8, 64, 32), jnp.float32)
    tg4 = jax.random.normal(k8, (8, 64, 32), jnp.float32)
    ln4 = jnp.array([64, 60, 50, 33, 20, 10, 3, 1], jnp.int32)
    l4 = masked_mse_loss(mo4, tg4, ln4, col_tile=512)
    jax.block_until_ready(l4)
    r4 = _reference(mo4, tg4, ln4)
    assert jnp.allclose(l4, r4, rtol=1e-4, atol=1e-6), (l4, r4)

    print("KERNEL_OK")
</pallas_src>

<mosaic_0001>
module attributes {stable_mosaic.version = 11 : i64} {
  func.func @kernel(%arg0: i32, %arg1: i32, %arg2: i32, %arg3: memref<1xi32, #tpu.memory_space<smem>>, %arg4: memref<1xi32, #tpu.memory_space<smem>>, %arg5: memref<8x1xi32, #tpu.memory_space<vmem>>, %arg6: memref<8x256xf32, #tpu.memory_space<vmem>>, %arg7: memref<8x256xf32, #tpu.memory_space<vmem>>, %arg8: memref<8x256xf32, #tpu.memory_space<vmem>>) attributes {dimension_semantics = [#tpu.dimension_semantics<parallel>, #tpu.dimension_semantics<parallel>, #tpu.dimension_semantics<arbitrary>], iteration_bounds = array<i64: 1, 1, 1>, scalar_prefetch = 2 : i64, scratch_operands = 0 : i64, tpu.core_type = #tpu.core_type<tc>, window_params = [{transform_indices = @transform_0, window_bounds = array<i64: 8, 1>}, {transform_indices = @transform_1, window_bounds = array<i64: 8, 256>}, {transform_indices = @transform_2, window_bounds = array<i64: 8, 256>}, {transform_indices = @transform_3, window_bounds = array<i64: 8, 256>}]} {
    %c1_i32 = arith.constant 1 : i32
    %0 = arith.muli %arg1, %c1_i32 : i32
    %1 = arith.addi %0, %arg2 : i32
    %c0_i32 = arith.constant 0 : i32
    %2 = arith.cmpi eq, %arg2, %c0_i32 : i32
    %3 = arith.extui %2 : i1 to i32
    %c0_i32_0 = arith.constant 0 : i32
    %4 = arith.cmpi ne, %3, %c0_i32_0 : i32
    scf.if %4 {
      %cst = arith.constant 0.000000e+00 : f32
      %19 = vector.broadcast %cst : f32 to vector<8x256xf32>
      %c0 = arith.constant 0 : index
      %c0_3 = arith.constant 0 : index
      %20 = vector.load %arg8[%c0, %c0_3] : memref<8x256xf32, #tpu.memory_space<vmem>>, vector<8x256xf32>
      tpu.vector_store %arg8[%c0, %c0_3], %19 {strides = array<i32>} : memref<8x256xf32, #tpu.memory_space<vmem>>, vector<8x256xf32>,
    } else {
    }
    %5 = arith.index_cast %arg0 : i32 to index
    %6 = memref.load %arg3[%5] : memref<1xi32, #tpu.memory_space<smem>>
    %7 = arith.cmpi slt, %1, %6 : i32
    %8 = arith.extui %7 : i1 to i32
    %c0_i32_1 = arith.constant 0 : i32
    %9 = arith.cmpi ne, %8, %c0_i32_1 : i32
    scf.if %9 {
      %c0 = arith.constant 0 : index
      %c0_3 = arith.constant 0 : index
      %19 = vector.load %arg8[%c0, %c0_3] : memref<8x256xf32, #tpu.memory_space<vmem>>, vector<8x256xf32>
      %cst = arith.constant 0.000000e+00 : f32
      %20 = vector.broadcast %cst : f32 to vector<8x256xf32>
      %c0_i32_4 = arith.constant 0 : i32
      %c256_i32 = arith.constant 256 : i32
      %21 = arith.muli %c0_i32_4, %c256_i32 : i32
      %22 = tpu.assume_multiple %21, 256 : i32
      %c0_5 = arith.constant 0 : index
      %23 = arith.index_cast %22 : i32 to index
      %24 = vector.load %arg6[%c0_5, %23] : memref<8x256xf32, #tpu.memory_space<vmem>>, vector<8x256xf32>
      %c0_6 = arith.constant 0 : index
      %25 = arith.index_cast %22 : i32 to index
      %26 = vector.load %arg7[%c0_6, %25] : memref<8x256xf32, #tpu.memory_space<vmem>>, vector<8x256xf32>
      %27 = arith.subf %24, %26 : vector<8x256xf32>
      %28 = arith.mulf %27, %27 : vector<8x256xf32>
      %29 = arith.addf %20, %28 : vector<8x256xf32>
      %c1_i32_7 = arith.constant 1 : i32
      %30 = arith.addf %19, %29 : vector<8x256xf32>
      %c0_8 = arith.constant 0 : index
      %c0_9 = arith.constant 0 : index
      %31 = vector.load %arg8[%c0_8, %c0_9] : memref<8x256xf32, #tpu.memory_space<vmem>>, vector<8x256xf32>
      tpu.vector_store %arg8[%c0_8, %c0_9], %30 {strides = array<i32>} : memref<8x256xf32, #tpu.memory_space<vmem>>, vector<8x256xf32>,
    } else {
    }
    %10 = arith.index_cast %arg0 : i32 to index
    %11 = memref.load %arg3[%10] : memref<1xi32, #tpu.memory_space<smem>>
    %12 = arith.cmpi sge, %1, %11 : i32
    %13 = arith.index_cast %arg0 : i32 to index
    %14 = memref.load %arg4[%13] : memref<1xi32, #tpu.memory_space<smem>>
    %15 = arith.cmpi slt, %1, %14 : i32
    %16 = arith.andi %12, %15 : i1
    %17 = arith.extui %16 : i1 to i32
    %c0_i32_2 = arith.constant 0 : i32
    %18 = arith.cmpi ne, %17, %c0_i32_2 : i32
    scf.if %18 {
      %c0 = arith.constant 0 : index
      %c0_3 = arith.constant 0 : index
      %19 = vector.load %arg5[%c0, %c0_3] : memref<8x1xi32, #tpu.memory_space<vmem>>, vector<8x1xi32>
      %c256_i32 = arith.constant 256 : i32
      %20 = arith.muli %1, %c256_i32 : i32
      %21 = vector.broadcast %20 : i32 to vector<8x1xi32>
      %22 = arith.subi %19, %21 : vector<8x1xi32>
      %23 = tpu.iota {dimensions = array<i32: 1>} : vector<8x256xi32>
      %c0_4 = arith.constant 0 : index
      %c0_5 = arith.constant 0 : index
      %24 = vector.load %arg8[%c0_4, %c0_5] : memref<8x256xf32, #tpu.memory_space<vmem>>, vector<8x256xf32>
      %cst = arith.constant 0.000000e+00 : f32
      %25 = vector.broadcast %cst : f32 to vector<8x256xf32>
      %c0_i32_6 = arith.constant 0 : i32
      %c256_i32_7 = arith.constant 256 : i32
      %26 = arith.muli %c0_i32_6, %c256_i32_7 : i32
      %27 = tpu.assume_multiple %26, 256 : i32
      %28 = vector.broadcast %27 : i32 to vector<8x1xi32>
      %29 = arith.subi %22, %28 : vector<8x1xi32>
      %30 = vector.broadcast %29 : vector<8x1xi32> to vector<8x256xi32>
      %31 = arith.cmpi slt, %23, %30 : vector<8x256xi32>
      %c0_8 = arith.constant 0 : index
      %32 = arith.index_cast %27 : i32 to index
      %33 = vector.load %arg6[%c0_8, %32] : memref<8x256xf32, #tpu.memory_space<vmem>>, vector<8x256xf32>
      %c0_9 = arith.constant 0 : index
      %34 = arith.index_cast %27 : i32 to index
      %35 = vector.load %arg7[%c0_9, %34] : memref<8x256xf32, #tpu.memory_space<vmem>>, vector<8x256xf32>
      %36 = arith.subf %33, %35 : vector<8x256xf32>
      %37 = arith.mulf %36, %36 : vector<8x256xf32>
      %cst_10 = arith.constant 0.000000e+00 : f32
      %38 = vector.broadcast %cst_10 : f32 to vector<8x256xf32>
      %39 = arith.select %31, %37, %38 : vector<8x256xi1>, vector<8x256xf32>
      %40 = arith.addf %25, %39 : vector<8x256xf32>
      %c1_i32_11 = arith.constant 1 : i32
      %41 = arith.addf %24, %40 : vector<8x256xf32>
      %c0_12 = arith.constant 0 : index
      %c0_13 = arith.constant 0 : index
      %42 = vector.load %arg8[%c0_12, %c0_13] : memref<8x256xf32, #tpu.memory_space<vmem>>, vector<8x256xf32>
      tpu.vector_store %arg8[%c0_12, %c0_13], %41 {strides = array<i32>} : memref<8x256xf32, #tpu.memory_space<vmem>>, vector<8x256xf32>,
    } else {
    }
    return
  }
  func.func @transform_0(%arg0: i32, %arg1: i32, %arg2: i32, %arg3: memref<1xi32, #tpu.memory_space<smem>>, %arg4: memref<1xi32, #tpu.memory_space<smem>>) -> (i32, i32) {
    %c0_i32 = arith.constant 0 : i32
    %c0_i32_0 = arith.constant 0 : i32
    return %arg0, %c0_i32 : i32, i32
  }
  func.func @transform_1(%arg0: i32, %arg1: i32, %arg2: i32, %arg3: memref<1xi32, #tpu.memory_space<smem>>, %arg4: memref<1xi32, #tpu.memory_space<smem>>) -> (i32, i32) {
    %c1_i32 = arith.constant 1 : i32
    %0 = arith.muli %arg1, %c1_i32 : i32
    %1 = arith.addi %0, %arg2 : i32
    %2 = arith.index_cast %arg0 : i32 to index
    %3 = memref.load %arg4[%2] : memref<1xi32, #tpu.memory_space<smem>>
    %c1_i32_0 = arith.constant 1 : i32
    %4 = arith.subi %3, %c1_i32_0 : i32
    %c0_i32 = arith.constant 0 : i32
    %5 = arith.maxsi %4, %c0_i32 : i32
    %6 = arith.minsi %1, %5 : i32
    %c0_i32_1 = arith.constant 0 : i32
    return %arg0, %6 : i32, i32
  }
  func.func @transform_2(%arg0: i32, %arg1: i32, %arg2: i32, %arg3: memref<1xi32, #tpu.memory_space<smem>>, %arg4: memref<1xi32, #tpu.memory_space<smem>>) -> (i32, i32) {
    %c1_i32 = arith.constant 1 : i32
    %0 = arith.muli %arg1, %c1_i32 : i32
    %1 = arith.addi %0, %arg2 : i32
    %2 = arith.index_cast %arg0 : i32 to index
    %3 = memref.load %arg4[%2] : memref<1xi32, #tpu.memory_space<smem>>
    %c1_i32_0 = arith.constant 1 : i32
    %4 = arith.subi %3, %c1_i32_0 : i32
    %c0_i32 = arith.constant 0 : i32
    %5 = arith.maxsi %4, %c0_i32 : i32
    %6 = arith.minsi %1, %5 : i32
    %c0_i32_1 = arith.constant 0 : i32
    return %arg0, %6 : i32, i32
  }
  func.func @transform_3(%arg0: i32, %arg1: i32, %arg2: i32, %arg3: memref<1xi32, #tpu.memory_space<smem>>, %arg4: memref<1xi32, #tpu.memory_space<smem>>) -> (i32, i32) {
    %c1_i32 = arith.constant 1 : i32
    %0 = arith.muli %arg0, %c1_i32 : i32
    %1 = arith.addi %0, %arg1 : i32
    %c0_i32 = arith.constant 0 : i32
    %c0_i32_0 = arith.constant 0 : i32
    return %1, %c0_i32 : i32, i32
  }
}

</mosaic_0001>

<llo_original>
// kernel: tpu_custom_call.1
$region0: #{tpu_custom_call.1}
  #allocation0 [shape = 'u32[]', space=smem, size = 0x4, offset = 0x4, fixed_abs, tag = 'smem constant byte address 0x4 - core index']
  #allocation1 [shape = 'u32[144,128]{1,0:T(1,128)}', space=vmem, size = 0x12000, scoped, tag = 'internal scratch']
  #allocation2 [shape = 's32[1]{0}', space=sflag, size = 0x4, scoped, tag = 'scoped memory for tpu_custom_call.1']
  #allocation3 [shape = 's32[1]{0:T(128)S(6)}', space=smem, size = 0x200, scoped, tag = 'prefetched SMEM operand 0']
  #allocation4 [shape = 's32[1]{0:T(128)S(6)}', space=smem, size = 0x200, scoped, tag = 'prefetched SMEM operand 1']
  %s0 = inlined_call_operand.<no memory space> [shape: s32[1], index: 0, kind: input, shape index: {}]
  %s1 = inlined_call_operand.<no memory space> [shape: s32[1], index: 1, kind: input, shape index: {}]
  %s2 = inlined_call_operand.vmem [shape: s32[8,1], index: 2, kind: input, shape index: {}]
  %s3 = inlined_call_operand.hbm [shape: f32[8,256], index: 3, kind: input, shape index: {}]
  %s4 = inlined_call_operand.vmem [shape: f32[8,256], index: 4, kind: input, shape index: {}]
  %s5 = inlined_call_operand.hbm [shape: f32[8,256], index: 5, kind: output, shape index: {}]
  %s6 = sld [smem:[#allocation0]]
  $region38: #{tpu_custom_call.1} parent=0
    _
  %s8 = ssub.s32 1, %s6
  %s9 = scalar_select 0, %s8, %s6
  %10 = sst [smem:[#allocation3]] %s0
  %11 = sst [smem:[#allocation4]] %s1
  $region1: #{tpu_custom_call.1} parent=0
    #allocation5 [shape = 'u8[8192]{0}', space=vmem, size = 0x2000, scoped, tag = 'input window, operand 3, single buffered']
    #allocation6 [shape = 's32[1]{0}', space=sflag, size = 0x4, scoped, tag = 'scoped memory for tpu_custom_call.1']
    #allocation7 [shape = 's32[1]{0}', space=sflag, size = 0x4, scoped, tag = 'scoped memory for tpu_custom_call.1']
    #allocation8 [shape = 'u8[8192]{0}', space=vmem, size = 0x2000, scoped, tag = 'output window, operand 0, single buffered']
    %12 = vsyncpa [#allocation6], 0
    %13 = vsyncpa [#allocation7], 0
    // Predicated region
    $region2: #{tpu_custom_call.1} parent=1 // pred_check
      _
    $region3: #{tpu_custom_call.1} parent=1 // pred_check_branch
      %15 = sbr.rel (0) target = $region5
    $region4: #{tpu_custom_call.1} parent=1 // pred_region
      _
    $region5: #{tpu_custom_call.1} parent=1 // pred_fallthru
      _
    // Predicated region
    $region6: #{tpu_custom_call.1} parent=1 // pred_check
      _
    $region7: #{tpu_custom_call.1} parent=1 // pred_check_branch
      %17 = sbr.rel (0) target = $region9
    $region8: #{tpu_custom_call.1} parent=1 // pred_region
      %s18 = sadd.s32 0, 0
      %s19 = sld [smem:[#allocation4]]
      %s20 = ssub.s32 %s19, 1
      %p21 = scmp.gt.s32.totalorder %s20, 0
      %s22 = scalar_select %p21, %s20, 0
      %p23 = scmp.lt.s32.totalorder %s18, %s22
      %s24 = scalar_select %p23, %s18, %s22
      %s25 = smul.u32 2, %s24
      %s27 = ssub.s32 256, 256
      %28 = vsyncadd [#allocation6], %s27
      %s29 = smul.addr %s25, 128
      %s30 = scalar_lea.hbm %s3, %s29
      %s32 = sshll.u32 [#allocation5], 4
      %s33 = int_to_ptr.vmem [resolvable:$true] %s32
      %35 = dma.hbm_to_vmem [thread:$0]  %s30, 256, %s33, [#allocation6]
    $region9: #{tpu_custom_call.1} parent=1 // pred_fallthru
      _
    // Predicated region
    $region10: #{tpu_custom_call.1} parent=1 // pred_check
      _
    $region11: #{tpu_custom_call.1} parent=1 // pred_check_branch
      %37 = sbr.rel (0) target = $region13
    $region12: #{tpu_custom_call.1} parent=1 // pred_region
      %s38 = sadd.s32 0, 0
      %s39 = sld [smem:[#allocation4]]
      %s40 = ssub.s32 %s39, 1
      %p41 = scmp.gt.s32.totalorder %s40, 0
      %s42 = scalar_select %p41, %s40, 0
      %p43 = scmp.lt.s32.totalorder %s38, %s42
      %s44 = scalar_select %p43, %s38, %s42
      %s45 = smul.u32 2, %s44
      %p46 = scmp.lt.s32.totalorder %s45, 1
      %s47 = scalar_select %p46, %s45, 1
      %s48 = smul.addr %s47, 8
      %s49 = scalar_lea.vmem %s4, %s48
      %s50 = sadd.s32 0, 0
      %s51 = sld [smem:[#allocation4]]
      %s52 = ssub.s32 %s51, 1
      %p53 = scmp.gt.s32.totalorder %s52, 0
      %s54 = scalar_select %p53, %s52, 0
      %p55 = scmp.lt.s32.totalorder %s50, %s54
      %s56 = scalar_select %p55, %s50, %s54
      %s57 = smul.u32 2, %s56
    $region13: #{tpu_custom_call.1} parent=1 // pred_fallthru
      _
    // Predicated region
    $region14: #{tpu_custom_call.1} parent=1 // pred_check
      _
    $region15: #{tpu_custom_call.1} parent=1 // pred_check_branch
      %59 = sbr.rel (0) target = $region17
    $region16: #{tpu_custom_call.1} parent=1 // pred_region
      %60 = dma.done [#allocation6], 256
    $region17: #{tpu_custom_call.1} parent=1 // pred_fallthru
      _
    %s61 = sadd.s32 0, 0
    %s62 = sld [smem:[#allocation4]]
    %s63 = ssub.s32 %s62, 1
    %p64 = scmp.gt.s32.totalorder %s63, 0
    %s65 = scalar_select %p64, %s63, 0
    %p66 = scmp.lt.s32.totalorder %s61, %s65
    %s67 = scalar_select %p66, %s61, %s65
    %s68 = smul.u32 2, %s67
    %p69 = scmp.lt.s32.totalorder %s68, 1
    %s70 = scalar_select %p69, %s68, 1
    %s71 = smul.addr %s70, 8
    %s72 = scalar_lea.vmem %s4, %s71
    %s73 = sadd.s32 0, 0
    %s74 = sld [smem:[#allocation4]]
    %s75 = ssub.s32 %s74, 1
    %p76 = scmp.gt.s32.totalorder %s75, 0
    %s77 = scalar_select %p76, %s75, 0
    %p78 = scmp.lt.s32.totalorder %s73, %s77
    %s79 = scalar_select %p78, %s73, %s77
    %s80 = smul.u32 2, %s79
    %s81 = sadd.s32 0, 0
    %s82 = sld [smem:[#allocation4]]
    %s83 = ssub.s32 %s82, 1
    %p84 = scmp.gt.s32.totalorder %s83, 0
    %s85 = scalar_select %p84, %s83, 0
    %p86 = scmp.lt.s32.totalorder %s81, %s85
    %s87 = scalar_select %p86, %s81, %s85
    %s88 = smul.u32 2, %s87
    %p89 = scmp.lt.s32.totalorder %s88, 1
    %s90 = scalar_select %p89, %s88, 1
    %s91 = smul.addr %s90, 8
    %s92 = scalar_lea.vmem %s4, %s91
    %s93 = sadd.s32 0, 0
    %s94 = sld [smem:[#allocation4]]
    %s95 = ssub.s32 %s94, 1
    %p96 = scmp.gt.s32.totalorder %s95, 0
    %s97 = scalar_select %p96, %s95, 0
    %p98 = scmp.lt.s32.totalorder %s93, %s97
    %s99 = scalar_select %p98, %s93, %s97
    %s100 = smul.u32 2, %s99
    %s101 = sadd.s32 0, 0
    %s102 = sadd.s32 0, 0
    %p103 = scmp.eq.s32.totalorder 0, 0
    // Predicated region
    $region18: #{tpu_custom_call.1} parent=1 // pred_check
      %p104 = pneg %p103
    $region19: #{tpu_custom_call.1} parent=1 // pred_check_branch
      %106 = sbr.rel (%p104) target = $region21
    $region20: #{tpu_custom_call.1} parent=1 // pred_region
      %107 = vst [vmem:[#allocation8] sm:$0xff] 0.0
      %108 = vst [vmem:[#allocation8 + $0x8] sm:$0xff] 0.0
    $region21: #{tpu_custom_call.1} parent=1 // pred_fallthru
      _
    %s109 = sld [smem:[#allocation3]]
    %p110 = scmp.lt.s32.totalorder %s102, %s109
    // Predicated region
    $region22: #{tpu_custom_call.1} parent=1 // pred_check
      %p111 = pneg %p110
    $region23: #{tpu_custom_call.1} parent=1 // pred_check_branch
      %113 = sbr.rel (%p111) target = $region25
    $region24: #{tpu_custom_call.1} parent=1 // pred_region
      %v114 = vld [vmem:[#allocation8] sm:$0xff]
      %v115 = vld [vmem:[#allocation8 + $0x8] sm:$0xff]
      %v116 = vld [vmem:[#allocation5] sm:$0xff]
      %v117 = vld [vmem:[#allocation5 + $0x8] sm:$0xff]
      %v118 = vld [vmem:[%s92] sm:$0xff]
      %v119 = vld [vmem:[%s92 + $0x8] sm:$0xff]
      %v120 = vsub.f32 %v116, %v118
      %v121 = vsub.f32 %v117, %v119
      %v122 = vmul.f32 %v120, %v120
      %v123 = vmul.f32 %v121, %v121
      %v124 = vadd.f32 %v122, 0.0
      %v125 = vadd.f32 %v123, 0.0
      %v126 = vadd.f32 %v114, %v124
      %v127 = vadd.f32 %v115, %v125
      %128 = vst [vmem:[#allocation8] sm:$0xff] %v126
      %129 = vst [vmem:[#allocation8 + $0x8] sm:$0xff] %v127
    $region25: #{tpu_custom_call.1} parent=1 // pred_fallthru
      _
    %s130 = sld [smem:[#allocation3]]
    %p131 = scmp.ge.s32.totalorder %s102, %s130
    %s132 = sld [smem:[#allocation4]]
    %p133 = scmp.lt.s32.totalorder %s102, %s132
    %p134 = pnand %p131, %p133
    %p135 = pneg %p134
    // Predicated region
    $region26: #{tpu_custom_call.1} parent=1 // pred_check
      _
    $region27: #{tpu_custom_call.1} parent=1 // pred_check_branch
      %137 = sbr.rel (%p134) target = $region29
    $region28: #{tpu_custom_call.1} parent=1 // pred_region
      %v138 = vld [vmem:[%s2] sm:$0xff]
      %s139 = smul.u32 %s102, 256
      %v140 = vstv %s139
      %v141 = vsub.s32 %v138, %v140
      %v142 = vlaneseq
      %v143 = vand.u32 %v142, 127
      %v144 = vadd.s32 %v143, 128
      %v145 = vld [vmem:[#allocation8] sm:$0xff]
      %v146 = vld [vmem:[#allocation8 + $0x8] sm:$0xff]
      %v147 = vstv 0
      %v148 = vsub.s32 %v141, %v147
      %149 = vset.pattern.permute.xlu0 0
      %150 = vperm.xlu0 %149, %v148
      %v151 = vpop.permute.xlu0 %150
      %vm152 = vcmp.lt.s32.totalorder %v143, %v151
      %vm153 = vcmp.lt.s32.totalorder %v144, %v151
      %v154 = vld [vmem:[#allocation5] sm:$0xff]
      %v155 = vld [vmem:[#allocation5 + $0x8] sm:$0xff]
      %v156 = vld [vmem:[%s92] sm:$0xff]
      %v157 = vld [vmem:[%s92 + $0x8] sm:$0xff]
      %v158 = vsub.f32 %v154, %v156
      %v159 = vsub.f32 %v155, %v157
      %v160 = vmul.f32 %v158, %v158
      %v161 = vmul.f32 %v159, %v159
      %v162 = vsel %vm152, %v160, 0.0
      %v163 = vsel %vm153, %v161, 0.0
      %v164 = vadd.f32 %v162, 0.0
      %v165 = vadd.f32 %v163, 0.0
      %v166 = vadd.f32 %v145, %v164
      %v167 = vadd.f32 %v146, %v165
      %168 = vst [vmem:[#allocation8] sm:$0xff] %v166
      %169 = vst [vmem:[#allocation8 + $0x8] sm:$0xff] %v167
    $region29: #{tpu_custom_call.1} parent=1 // pred_fallthru
      _
    // Predicated region
    $region30: #{tpu_custom_call.1} parent=1 // pred_check
      _
    $region31: #{tpu_custom_call.1} parent=1 // pred_check_branch
      %171 = sbr.rel (0) target = $region33
    $region32: #{tpu_custom_call.1} parent=1 // pred_region
      %s172 = sadd.s32 0, 0
      %s174 = ssub.s32 256, 256
      %175 = vsyncadd [#allocation7], %s174
      %s176 = smul.addr %s172, 2
      %s177 = smul.addr %s176, 128
      %s178 = scalar_lea.hbm %s5, %s177
      %s180 = sshll.u32 [#allocation8], 4
      %s181 = int_to_ptr.vmem [resolvable:$true] %s180
      %183 = dma.vmem_to_hbm [thread:$0]  %s181, 256, %s178, [#allocation7]
    $region33: #{tpu_custom_call.1} parent=1 // pred_fallthru
      _
    // Predicated region
    $region34: #{tpu_custom_call.1} parent=1 // pred_check
      _
    $region35: #{tpu_custom_call.1} parent=1 // pred_check_branch
      %185 = sbr.rel (0) target = $region37
    $region36: #{tpu_custom_call.1} parent=1 // pred_region
      %186 = dma.done [#allocation7], 256
    $region37: #{tpu_custom_call.1} parent=1 // pred_fallthru
      _
    %187 = vsyncpa [#allocation6], 1
    %188 = vsyncpa [#allocation7], 1

</llo_original>
